<compile_context>
chip_gen: v5e
topology: v5e:2x2
jax: 0.10.0
libtpu: 0.0.40
codegen_flags: <defaults>
</compile_context>

<pallas_src>
import functools

import jax
import jax.numpy as jnp
from jax.experimental import pallas as pl
from jax.experimental.pallas import tpu as pltpu

ACTIVITY_N_CLASSES = 6
LANE = 128            # lane-dense classifier width
SUBLANE = 8           # f32 sublane count


def _round_up(x, m):
    return ((x + m - 1) // m) * m


def _span_cls_kernel(x_ref, w_ref, b_ref, o_ref, acc_ref, *,
                     seq_len, seq_tile, mask_tail):
    # x_ref: [TB, TS, H]  w_ref: [H, C_PAD]  b_ref: [1, C_PAD]
    # o_ref: [TB, C_PAD]  acc_ref: [TB, H] f32 scratch (persists across k)
    k = pl.program_id(1)

    @pl.when(k == 0)
    def _():
        acc_ref[...] = jnp.zeros_like(acc_ref)

    x = x_ref[...]
    if mask_tail:
        # Ragged last sequence tile: out-of-bounds block contents are
        # unspecified (NOT zero), so zero them before accumulating.
        remaining = seq_len - k * seq_tile
        pos = jax.lax.broadcasted_iota(jnp.int32, x.shape, 1)
        x = jnp.where(pos < remaining, x, jnp.zeros_like(x))

    # Partial sum over this sequence tile, accumulated in f32 without
    # materializing an f32 copy of the whole tile.
    acc_ref[...] += jnp.sum(x, axis=1, dtype=jnp.float32)

    @pl.when(k == pl.num_programs(1) - 1)
    def _():
        # Mean over the FULL (unpadded) sequence length, once, in the epilogue.
        pooled = acc_ref[...] * (1.0 / seq_len)                  # [TB, H] f32
        logits = jnp.dot(pooled, w_ref[...],                     # native-dtype RHS
                         preferred_element_type=jnp.float32)     # [TB, C_PAD]
        o_ref[...] = logits + b_ref[...].astype(jnp.float32)


def _choose_tiles(B, S, H, dtype):
    itemsize = jnp.dtype(dtype).itemsize
    # dtype-aware sublane packing for the sequence (sublane) axis of the x
    # tile: 8 rows/vreg for 32-bit, 16 for bf16, 32 for int8/fp8.
    sub = SUBLANE * max(1, 4 // itemsize)

    # Batch tile: up to 128 for a full-height epilogue matmul, but split so
    # the "parallel" batch axis yields >= 2 grid tiles when B allows it
    # (v7x: 2 TensorCores share the parallel grid axes).
    if B < SUBLANE:
        tb = B                                   # exact fit, no ragged edge
    else:
        tb = min(128, _round_up(B, SUBLANE))
        if B > SUBLANE:
            tb = max(SUBLANE, min(tb, _round_up(pl.cdiv(B, 2), SUBLANE)))

    # Sequence tile from a ~4 MiB per-buffer budget (x is double-buffered).
    budget = 4 * 1024 * 1024
    ts = budget // max(1, tb * H * itemsize)
    while ts < sub and tb > SUBLANE:             # huge H: shrink tb first
        tb = max(SUBLANE, ((tb // 2) // SUBLANE) * SUBLANE)
        ts = budget // max(1, tb * H * itemsize)
    ts = max(sub, (ts // sub) * sub)
    if ts >= S:
        ts = S                                   # whole sequence in one tile
    return tb, ts


def aril_span_cls_forward(features, weight, bias):
    """features: [B, S, H]; weight: [H, C]; bias: [C].

    Returns {'activity': [B, C] float32} matching ARILSpanCLS.forward
    (mean-pool over sequence, then linear projection).
    """
    B, S, H = features.shape
    C = weight.shape[1]
    itemsize = jnp.dtype(features.dtype).itemsize

    tb, ts = _choose_tiles(B, S, H, features.dtype)
    Cp = _round_up(C, LANE)                      # lane-dense classifier width

    # Only the tiny classifier tensors are padded; features go to the kernel
    # untouched (no extra full-tensor HBM pass).  Padded class columns are
    # sliced off below.
    w = jnp.pad(weight, ((0, 0), (0, Cp - C)))
    b2d = jnp.pad(bias, (0, Cp - C)).reshape(1, Cp)

    grid = (pl.cdiv(B, tb), pl.cdiv(S, ts))
    mask_tail = (S % ts) != 0                    # static: select only if needed

    # Explicit scoped-VMEM limit from the actual footprint (v5e default is
    # only 16 MiB; v7x physical is 64 MiB -> clamp at 48 MiB).
    need = (2 * tb * ts * H * itemsize                                 # x (2 bufs)
            + 2 * H * Cp * jnp.dtype(w.dtype).itemsize                 # weight
            + 2 * Cp * jnp.dtype(b2d.dtype).itemsize                   # bias
            + 2 * tb * Cp * 4                                          # out (2 bufs)
            + tb * H * 4)                                              # acc scratch
    vmem_limit = int(min(max(2 * need, 16 * 1024 * 1024), 48 * 1024 * 1024))

    cost = pl.CostEstimate(
        flops=B * S * H + 2 * B * H * Cp,
        transcendentals=0,
        bytes_accessed=(B * S * H * itemsize
                        + H * Cp * jnp.dtype(w.dtype).itemsize
                        + B * Cp * 4),
    )

    out = pl.pallas_call(
        functools.partial(_span_cls_kernel, seq_len=S, seq_tile=ts,
                          mask_tail=mask_tail),
        out_shape=jax.ShapeDtypeStruct((B, Cp), jnp.float32),
        grid=grid,
        in_specs=[
            pl.BlockSpec((tb, ts, H), lambda i, k: (i, k, 0)),
            pl.BlockSpec((H, Cp), lambda i, k: (0, 0)),
            pl.BlockSpec((1, Cp), lambda i, k: (0, 0)),
        ],
        out_specs=pl.BlockSpec((tb, Cp), lambda i, k: (i, 0)),
        scratch_shapes=[pltpu.VMEM((tb, H), jnp.float32)],
        compiler_params=pltpu.CompilerParams(
            dimension_semantics=("parallel", "arbitrary"),
            vmem_limit_bytes=vmem_limit),
        cost_estimate=cost,
    )(features, w, b2d)

    return {'activity': out[:, :C]}


def reference_forward(features, weight, bias):
    pooled = jnp.mean(features.astype(jnp.float32), axis=1)
    return {'activity': pooled @ weight.astype(jnp.float32)
            + bias.astype(jnp.float32)}


if __name__ == "__main__":
    key = jax.random.PRNGKey(0)
    k_x, k_w, k_b = jax.random.split(key, 3)

    # small shapes consistent with the module: batch=2, seq=8, hidden=32
    B, S, H = 2, 8, 32
    C = ACTIVITY_N_CLASSES

    features = jax.random.normal(k_x, (B, S, H), dtype=jnp.float32)
    weight = jax.random.normal(k_w, (H, C), dtype=jnp.float32) * (1.0 / H ** 0.5)
    bias = jax.random.normal(k_b, (C,), dtype=jnp.float32) * 0.01

    out = aril_span_cls_forward(features, weight, bias)
    jax.block_until_ready(out['activity'])

    ref = reference_forward(features, weight, bias)
    assert out['activity'].shape == (B, C)
    assert jnp.allclose(out['activity'], ref['activity'], atol=1e-5, rtol=1e-5)

    print("KERNEL_OK")
</pallas_src>

<mosaic_0001>
module attributes {stable_mosaic.version = 11 : i64} {
  func.func @_span_cls_kernel(%arg0: i32, %arg1: i32, %arg2: memref<2x8x32xf32, #tpu.memory_space<vmem>>, %arg3: memref<32x128xf32, #tpu.memory_space<vmem>>, %arg4: memref<1x128xf32, #tpu.memory_space<vmem>>, %arg5: memref<2x128xf32, #tpu.memory_space<vmem>>, %arg6: memref<2x32xf32, #tpu.memory_space<vmem>>) attributes {dimension_semantics = [#tpu.dimension_semantics<parallel>, #tpu.dimension_semantics<arbitrary>], iteration_bounds = array<i64: 1, 1>, scalar_prefetch = 0 : i64, scratch_operands = 1 : i64, tpu.core_type = #tpu.core_type<tc>, window_params = [{transform_indices = @transform_0, window_bounds = array<i64: 2, 8, 32>}, {pipeline_mode = #tpu.pipeline_mode<synchronous>, transform_indices = @transform_1, window_bounds = array<i64: 32, 128>}, {pipeline_mode = #tpu.pipeline_mode<synchronous>, transform_indices = @transform_2, window_bounds = array<i64: 1, 128>}, {transform_indices = @transform_3, window_bounds = array<i64: 2, 128>}]} {
    %c0_i32 = arith.constant 0 : i32
    %0 = arith.cmpi eq, %arg1, %c0_i32 : i32
    %1 = arith.extui %0 : i1 to i32
    %c0_i32_0 = arith.constant 0 : i32
    %2 = arith.cmpi ne, %1, %c0_i32_0 : i32
    scf.if %2 {
      %cst_9 = arith.constant 0.000000e+00 : f32
      %11 = vector.broadcast %cst_9 : f32 to vector<2x32xf32>
      %c0_10 = arith.constant 0 : index
      %c0_11 = arith.constant 0 : index
      %12 = vector.load %arg6[%c0_10, %c0_11] : memref<2x32xf32, #tpu.memory_space<vmem>>, vector<2x32xf32>
      tpu.vector_store %arg6[%c0_10, %c0_11], %11 {strides = array<i32>} : memref<2x32xf32, #tpu.memory_space<vmem>>, vector<2x32xf32>,
    } else {
    }
    %c0 = arith.constant 0 : index
    %c0_1 = arith.constant 0 : index
    %c0_2 = arith.constant 0 : index
    %3 = vector.load %arg2[%c0, %c0_1, %c0_2] : memref<2x8x32xf32, #tpu.memory_space<vmem>>, vector<2x8x32xf32>
    %c0_3 = arith.constant 0 : index
    %c0_4 = arith.constant 0 : index
    %4 = vector.load %arg6[%c0_3, %c0_4] : memref<2x32xf32, #tpu.memory_space<vmem>>, vector<2x32xf32>
    %cst = arith.constant dense<0.000000e+00> : vector<2x32xf32>
    %5 = vector.multi_reduction <add>, %3, %cst [1] : vector<2x8x32xf32> to vector<2x32xf32>
    %6 = arith.addf %4, %5 : vector<2x32xf32>
    %c0_5 = arith.constant 0 : index
    %c0_6 = arith.constant 0 : index
    %7 = vector.load %arg6[%c0_5, %c0_6] : memref<2x32xf32, #tpu.memory_space<vmem>>, vector<2x32xf32>
    tpu.vector_store %arg6[%c0_5, %c0_6], %6 {strides = array<i32>} : memref<2x32xf32, #tpu.memory_space<vmem>>, vector<2x32xf32>,
    %c0_i32_7 = arith.constant 0 : i32
    %8 = arith.cmpi eq, %arg1, %c0_i32_7 : i32
    %9 = arith.extui %8 : i1 to i32
    %c0_i32_8 = arith.constant 0 : i32
    %10 = arith.cmpi ne, %9, %c0_i32_8 : i32
    scf.if %10 {
      %c0_9 = arith.constant 0 : index
      %c0_10 = arith.constant 0 : index
      %11 = vector.load %arg6[%c0_9, %c0_10] : memref<2x32xf32, #tpu.memory_space<vmem>>, vector<2x32xf32>
      %cst_11 = arith.constant 1.250000e-01 : f32
      %12 = vector.broadcast %cst_11 : f32 to vector<2x32xf32>
      %13 = arith.mulf %11, %12 : vector<2x32xf32>
      %c0_12 = arith.constant 0 : index
      %c0_13 = arith.constant 0 : index
      %14 = vector.load %arg3[%c0_12, %c0_13] : memref<32x128xf32, #tpu.memory_space<vmem>>, vector<32x128xf32>
      %cst_14 = arith.constant dense<0.000000e+00> : vector<2x128xf32>
      %15 = tpu.matmul %13, %14, %cst_14 {dimension_numbers = #tpu.dot_dimension_numbers<[1], [0], [0], [1], [0, 0, 1, 1], [], []>} : vector<2x32xf32>, vector<32x128xf32>, vector<2x128xf32> -> vector<2x128xf32>
      %c0_15 = arith.constant 0 : index
      %c0_16 = arith.constant 0 : index
      %16 = vector.load %arg4[%c0_15, %c0_16] : memref<1x128xf32, #tpu.memory_space<vmem>>, vector<1x128xf32>
      %17 = vector.broadcast %16 : vector<1x128xf32> to vector<2x128xf32>
      %18 = arith.addf %15, %17 : vector<2x128xf32>
      %c0_17 = arith.constant 0 : index
      %c0_18 = arith.constant 0 : index
      %19 = vector.load %arg5[%c0_17, %c0_18] : memref<2x128xf32, #tpu.memory_space<vmem>>, vector<2x128xf32>
      tpu.vector_store %arg5[%c0_17, %c0_18], %18 {strides = array<i32>} : memref<2x128xf32, #tpu.memory_space<vmem>>, vector<2x128xf32>,
    } else {
    }
    return
  }
  func.func @transform_0(%arg0: i32, %arg1: i32) -> (i32, i32, i32) {
    %c0_i32 = arith.constant 0 : i32
    %c0_i32_0 = arith.constant 0 : i32
    return %arg0, %arg1, %c0_i32 : i32, i32, i32
  }
  func.func @transform_1(%arg0: i32, %arg1: i32) -> (i32, i32) {
    %c0_i32 = arith.constant 0 : i32
    %c0_i32_0 = arith.constant 0 : i32
    %c0_i32_1 = arith.constant 0 : i32
    return %c0_i32, %c0_i32_0 : i32, i32
  }
  func.func @transform_2(%arg0: i32, %arg1: i32) -> (i32, i32) {
    %c0_i32 = arith.constant 0 : i32
    %c0_i32_0 = arith.constant 0 : i32
    %c0_i32_1 = arith.constant 0 : i32
    return %c0_i32, %c0_i32_0 : i32, i32
  }
  func.func @transform_3(%arg0: i32, %arg1: i32) -> (i32, i32) {
    %c0_i32 = arith.constant 0 : i32
    %c0_i32_0 = arith.constant 0 : i32
    return %arg0, %c0_i32 : i32, i32
  }
}

</mosaic_0001>

<llo_original>
// kernel: tpu_custom_call.1
$region0: #{tpu_custom_call.1}
  #allocation0 [shape = 'u32[]', space=smem, size = 0x4, offset = 0x4, fixed_abs, tag = 'smem constant byte address 0x4 - core index']
  #allocation1 [shape = 'u32[72,128]{1,0:T(1,128)}', space=vmem, size = 0x9000, scoped, tag = 'internal scratch']
  #allocation2 [shape = 'f32[2,32]{1,0:T(2,128)}', space=vmem, size = 0x400, scoped, tag = 'scratch operand']
  %s0 = inlined_call_operand.hbm [shape: f32[2,8,32], index: 0, kind: input, shape index: {}]
  %s1 = inlined_call_operand.hbm [shape: f32[32,128], index: 1, kind: input, shape index: {}]
  %s2 = inlined_call_operand.vmem [shape: f32[1,128], index: 2, kind: input, shape index: {}]
  %s3 = inlined_call_operand.hbm [shape: f32[2,128], index: 3, kind: output, shape index: {}]
  %s4 = sld [smem:[#allocation0]]
  $region38: #{tpu_custom_call.1} parent=0
    _
  %s6 = ssub.s32 1, %s4
  %s7 = scalar_select 0, %s6, %s4
  $region1: #{tpu_custom_call.1} parent=0
    #allocation3 [shape = 'u8[8192]{0}', space=vmem, size = 0x2000, scoped, tag = 'input window, operand 0, single buffered']
    #allocation4 [shape = 's32[1]{0}', space=sflag, size = 0x4, scoped, tag = 'scoped memory for tpu_custom_call.1']
    #allocation5 [shape = 's32[1]{0}', space=sflag, size = 0x4, scoped, tag = 'scoped memory for tpu_custom_call.1']
    #allocation6 [shape = 'u8[16384]{0}', space=vmem, size = 0x4000, scoped, tag = 'input window, operand 1, single buffered']
    #allocation7 [shape = 's32[1]{0}', space=sflag, size = 0x4, scoped, tag = 'scoped memory for tpu_custom_call.1']
    #allocation8 [shape = 'u8[1024]{0}', space=vmem, size = 0x400, scoped, tag = 'output window, operand 0, single buffered']
    %8 = vsyncpa [#allocation4], 0
    %9 = vsyncpa [#allocation7], 0
    %10 = vsyncpa [#allocation5], 0
    // Predicated region
    $region2: #{tpu_custom_call.1} parent=1 // pred_check
      _
    $region3: #{tpu_custom_call.1} parent=1 // pred_check_branch
      %12 = sbr.rel (0) target = $region5
    $region4: #{tpu_custom_call.1} parent=1 // pred_region
      %14 = vsyncadd [#allocation4], 0
      %s15 = sshll.u32 %s0, 4
      %s16 = int_to_ptr.hbm [resolvable:$true] %s15
      %s17 = sshll.u32 [#allocation3], 4
      %s18 = int_to_ptr.vmem [resolvable:$true] %s17
      %23 = dma.hbm_to_vmem [thread:$0]  %s16, 256, %s18, [#allocation4], 128, 128, 8
    $region5: #{tpu_custom_call.1} parent=1 // pred_fallthru
      _
    // Predicated region
    $region6: #{tpu_custom_call.1} parent=1 // pred_check
      _
    $region7: #{tpu_custom_call.1} parent=1 // pred_check_branch
      %25 = sbr.rel (0) target = $region9
    $region8: #{tpu_custom_call.1} parent=1 // pred_region
      %27 = vsyncadd [#allocation7], 0
      %s28 = sshll.u32 %s1, 4
      %s29 = int_to_ptr.hbm [resolvable:$true] %s28
      %s30 = sshll.u32 [#allocation6], 4
      %s31 = int_to_ptr.vmem [resolvable:$true] %s30
      %36 = dma.hbm_to_vmem [thread:$0]  %s29, 512, %s31, [#allocation7], 128, 128, 8
    $region9: #{tpu_custom_call.1} parent=1 // pred_fallthru
      _
    // Predicated region
    $region10: #{tpu_custom_call.1} parent=1 // pred_check
      _
    $region11: #{tpu_custom_call.1} parent=1 // pred_check_branch
      %38 = sbr.rel (0) target = $region13
    $region12: #{tpu_custom_call.1} parent=1 // pred_region
      _
    $region13: #{tpu_custom_call.1} parent=1 // pred_fallthru
      _
    // Predicated region
    $region14: #{tpu_custom_call.1} parent=1 // pred_check
      _
    $region15: #{tpu_custom_call.1} parent=1 // pred_check_branch
      %40 = sbr.rel (0) target = $region17
    $region16: #{tpu_custom_call.1} parent=1 // pred_region
      %42 = dma.done [#allocation4], 256
    $region17: #{tpu_custom_call.1} parent=1 // pred_fallthru
      _
    // Predicated region
    $region18: #{tpu_custom_call.1} parent=1 // pred_check
      _
    $region19: #{tpu_custom_call.1} parent=1 // pred_check_branch
      %44 = sbr.rel (0) target = $region21
    $region20: #{tpu_custom_call.1} parent=1 // pred_region
      %46 = dma.done [#allocation7], 512
    $region21: #{tpu_custom_call.1} parent=1 // pred_fallthru
      _
    %p47 = scmp.eq.s32.totalorder 0, 0
    // Predicated region
    $region22: #{tpu_custom_call.1} parent=1 // pred_check
      %p48 = pneg %p47
    $region23: #{tpu_custom_call.1} parent=1 // pred_check_branch
      %50 = sbr.rel (%p48) target = $region25
    $region24: #{tpu_custom_call.1} parent=1 // pred_region
      %vm51 = vcmask 254976
      %52 = vst.msk [vmem:[#allocation2] sm:$0x3] %vm51, 0.0
    $region25: #{tpu_custom_call.1} parent=1 // pred_fallthru
      _
    %v53 = vld [vmem:[#allocation3] sm:$0xff]
    %v54 = vld [vmem:[#allocation3 + $0x8] sm:$0xff]
    %v55 = vld [vmem:[#allocation2] sm:$0x3]
    %vm56 = vcmask 261120
    %v57 = vsel %vm56, %v53, 0.0
    %v58 = vrot.slane %v57, 4
    %v59 = vadd.f32 %v57, %v58
    %v60 = vrot.slane %v59, 2
    %v61 = vadd.f32 %v59, %v60
    %v62 = vrot.slane %v61, 1
    %v63 = vadd.f32 %v61, %v62
    %v64 = vsel %vm56, %v54, 0.0
    %v65 = vrot.slane %v64, 4
    %v66 = vadd.f32 %v64, %v65
    %v67 = vrot.slane %v66, 2
    %v68 = vadd.f32 %v66, %v67
    %v69 = vrot.slane %v68, 1
    %v70 = vadd.f32 %v68, %v69
    %vm73 = vcmask 1041409
    %v74 = vsel %vm73, %v70, %v63
    %v76 = vadd.f32 %v55, %v74
    %vm77 = vcmask 254976
    %78 = vst.msk [vmem:[#allocation2] sm:$0x3] %vm77, %v76
    // Predicated region
    $region26: #{tpu_custom_call.1} parent=1 // pred_check
      %p79 = pneg %p47
    $region27: #{tpu_custom_call.1} parent=1 // pred_check_branch
      %81 = sbr.rel (%p79) target = $region29
    $region28: #{tpu_custom_call.1} parent=1 // pred_region
      %v82 = vld [vmem:[#allocation2] sm:$0x3]
      %v83 = vmul.f32 %v82, 0.125
      %v84 = vld [vmem:[#allocation6] sm:$0xff]
      %v85 = vld [vmem:[#allocation6 + $0x8] sm:$0xff]
      %v86 = vld [vmem:[#allocation6 + $0x10] sm:$0xff]
      %v87 = vld [vmem:[#allocation6 + $0x18] sm:$0xff]
      %v88 = vld [vmem:[%s2] sm:$0x1]
      %v90 = vperm.slane %v88, 0
      %v93 = vsel %vm56, %v83, 0
      %95 = vmatpush.msra.mxu0 0.0
      %96 = vmatpush.msra.mxu0 0.0
      %97 = vmatpush.msra.mxu0 0.0
      %98 = vmatpush.msra.mxu0 0.0
      %99 = vmatpush.msra.mxu0 0.0
      %100 = vmatpush.msra.mxu0 0.0
      %101 = vmatpush.msra.mxu0 0.0
      %102 = vmatpush.msra.mxu0 0.0
      %103 = vmatpush.msra.mxu0 0.0
      %104 = vmatpush.msra.mxu0 0.0
      %105 = vmatpush.msra.mxu0 0.0
      %106 = vmatpush.msra.mxu0 0.0
      %107 = vmatpush.msra.mxu0 %v87
      %108 = vmatpush.msra.mxu0 %v86
      %109 = vmatpush.msra.mxu0 %v85
      %110 = vmatpush.msra.mxu0 %v84
      %111 = vmatmul.f32.gmra.mxu0 %v93
      %v112 = vpop.f32.mrf.mxu0
      %v113 = vadd.f32 %v90, %v112
      %114 = vdwg.mxu0
      %115 = vst [vmem:[#allocation8] sm:$0x3] %v113
    $region29: #{tpu_custom_call.1} parent=1 // pred_fallthru
      _
    // Predicated region
    $region30: #{tpu_custom_call.1} parent=1 // pred_check
      _
    $region31: #{tpu_custom_call.1} parent=1 // pred_check_branch
      %117 = sbr.rel (0) target = $region33
    $region32: #{tpu_custom_call.1} parent=1 // pred_region
      %119 = vsyncadd [#allocation5], 0
      %s121 = sshll.u32 [#allocation8], 4
      %s122 = int_to_ptr.vmem [resolvable:$true] %s121
      %s123 = sshll.u32 %s3, 4
      %s124 = int_to_ptr.hbm [resolvable:$true] %s123
      %126 = dma.vmem_to_hbm [thread:$0]  %s122, 32, %s124, [#allocation5]
    $region33: #{tpu_custom_call.1} parent=1 // pred_fallthru
      _
    // Predicated region
    $region34: #{tpu_custom_call.1} parent=1 // pred_check
      _
    $region35: #{tpu_custom_call.1} parent=1 // pred_check_branch
      %128 = sbr.rel (0) target = $region37
    $region36: #{tpu_custom_call.1} parent=1 // pred_region
      %130 = dma.done [#allocation5], 32
    $region37: #{tpu_custom_call.1} parent=1 // pred_fallthru
      _
    %131 = vsyncpa [#allocation4], 1
    %132 = vsyncpa [#allocation7], 1
    %133 = vsyncpa [#allocation5], 1

</llo_original>
